<compile_context>
chip_gen: v7x
topology: tpu7x:2x2x1
jax: 0.10.0
libtpu: 0.0.40
codegen_flags: <defaults>
</compile_context>

<pallas_src>
import jax
import jax.numpy as jnp
from jax.experimental import pallas as pl
from jax.experimental.pallas import tpu as pltpu


def _self_output_kernel(x_ref, w_ref, b_ref, r_ref, o_ref):
    # x_ref: (tm, H_in)   activation tile (VMEM-resident across the inner N loop)
    # w_ref: (H_in, tn)   pre-transposed weight tile ([in, out] layout)
    # b_ref: (1, tn)      bias tile
    # r_ref: (tm, tn)     residual (input_tensor) tile
    # o_ref: (tm, tn)     output tile
    acc = jnp.dot(x_ref[...], w_ref[...], preferred_element_type=jnp.float32)
    acc = acc + b_ref[...].astype(jnp.float32) + r_ref[...].astype(jnp.float32)
    o_ref[...] = acc.astype(o_ref.dtype)


def _round_up(x, m):
    return ((x + m - 1) // m) * m


def _vmem_capacity_bytes():
    """Physical VMEM per TensorCore (conservative 64 MiB fallback ~ v7x)."""
    try:
        info = pltpu.get_tpu_info()
        cap = getattr(info, "vmem_capacity_bytes", None)
        if cap:
            return int(cap)
    except Exception:
        pass
    return 64 * 1024 * 1024


def _vmem_estimate_bytes(tm, tn, h_in, itemsize):
    """Pipeline footprint: 2x-buffered x/w/bias/residual/out tiles + f32 acc."""
    two_buf = 2 * itemsize * (tm * h_in        # activation tile
                              + h_in * tn      # weight tile
                              + 8 * tn         # bias tile (sublane-padded)
                              + 2 * tm * tn)   # residual + output tiles
    acc = tm * tn * 4                          # f32 epilogue intermediate
    return two_buf + acc


def _plan_tiles(m, h_in, h_out, itemsize, budget):
    # Sub-32-bit dtypes pack along sublanes: min row tile 16 for bf16, 8 for f32.
    row_align = {1: 32, 2: 16}.get(itemsize, 8)
    m_ceil = _round_up(m, row_align)
    probe_tm = min(m_ceil, 256)

    # --- tn: prefer full weight residency (N grid axis collapses to 1). ---
    tn = h_out
    if _vmem_estimate_bytes(probe_tm, tn, h_in, itemsize) > budget:
        # Weight too large to hold whole: stream it in 256-multiple slices
        # (v6e/v7x MXU is 256 wide); 128 only as a last resort.
        for cand in (2048, 1024, 512, 256, 128):
            if (cand <= h_out and h_out % cand == 0
                    and _vmem_estimate_bytes(probe_tm, cand, h_in, itemsize) <= budget):
                tn = cand
                break

    # --- tm: largest candidate whose pipeline footprint fits the budget. ---
    tm = row_align
    for cand in (2048, 1024, 512, 256, 128, 64, 32, 16, 8):
        if cand % row_align or cand > m_ceil:
            continue
        if _vmem_estimate_bytes(cand, tn, h_in, itemsize) <= budget:
            tm = cand
            break
    return tm, tn


def preln_bert_self_output_forward(hidden_states, input_tensor, weight, bias,
                                   dropout_prob=0.0, *, vmem_budget_bytes=None):
    """Pallas TPU implementation of PreLNBertSelfOutput.forward (inference).

    hidden_states: [B, S, H]  (attention output)
    input_tensor:  [B, S, H]  (residual stream)
    weight:        [H, H]     PyTorch nn.Linear layout ([out, in])
    bias:          [H]
    """
    if dropout_prob:
        # TODO(synk): training-mode dropout (stochastic mask via pltpu.prng_*)
        # is not implemented; this kernel covers the eval/inference path only.
        raise NotImplementedError("dropout_prob must be 0.0 (eval/inference mode).")

    B, S, h_in = hidden_states.shape
    h_out = weight.shape[0]
    M = B * S
    dtype = hidden_states.dtype
    itemsize = jnp.dtype(dtype).itemsize

    vmem_cap = _vmem_capacity_bytes()
    budget = vmem_budget_bytes if vmem_budget_bytes is not None else vmem_cap // 2
    vmem_limit = int(min(vmem_cap, budget + (16 << 20)))

    tm, tn = _plan_tiles(M, h_in, h_out, itemsize, budget)
    M_pad = _round_up(M, tm)

    x2d = hidden_states.reshape(M, h_in)
    r2d = input_tensor.reshape(M, h_out)
    if M_pad != M:
        pad = M_pad - M
        x2d = jnp.pad(x2d, ((0, pad), (0, 0)))
        r2d = jnp.pad(r2d, ((0, pad), (0, 0)))

    # One-time transpose to [in, out]; for frozen inference weights this is a
    # single [H, H] op (folded/cached under jit) and removes any per-grid-step
    # XLU transpose of the weight tile inside the kernel.
    w_t = weight.T
    b2d = bias.reshape(1, h_out)

    # Grid: M outer, N inner.  The activation tile index is constant across
    # the inner N loop (stays VMEM-resident); when tn == H_out the N axis is 1
    # and the weight is DMA'd exactly once for the whole kernel.
    grid = (M_pad // tm, h_out // tn)

    out2d = pl.pallas_call(
        _self_output_kernel,
        out_shape=jax.ShapeDtypeStruct((M_pad, h_out), dtype),
        grid_spec=pltpu.PrefetchScalarGridSpec(
            num_scalar_prefetch=0,
            grid=grid,
            in_specs=[
                pl.BlockSpec((tm, h_in), lambda i, j: (i, 0)),   # activations (resident over j)
                pl.BlockSpec((h_in, tn), lambda i, j: (0, j)),   # weight [in, out]
                pl.BlockSpec((1, tn),    lambda i, j: (0, j)),   # bias
                pl.BlockSpec((tm, tn),   lambda i, j: (i, j)),   # residual
            ],
            out_specs=pl.BlockSpec((tm, tn), lambda i, j: (i, j)),
        ),
        compiler_params=pltpu.CompilerParams(
            dimension_semantics=("parallel", "parallel"),
            vmem_limit_bytes=vmem_limit,
        ),
        # NOTE: input_output_aliases={3: 0} would let XLA reuse the residual
        # buffer for the output, but it donates the caller's input_tensor, so
        # it is intentionally left off in this standalone wrapper.
    )(x2d, w_t, b2d, r2d)

    if M_pad != M:
        out2d = out2d[:M]
    return out2d.reshape(B, S, h_out)


if __name__ == "__main__":
    root = jax.random.PRNGKey(0)

    def run_case(batch, seq, hidden, dtype, atol, rtol, **fwd_kwargs):
        k = jax.random.fold_in(root, hidden * 10000 + batch * 100 + seq)
        k_w, k_b, k_h, k_r = jax.random.split(k, 4)

        # nn.Linear default init: U(-1/sqrt(H), 1/sqrt(H))
        bound = 1.0 / (hidden ** 0.5)
        weight = jax.random.uniform(k_w, (hidden, hidden), jnp.float32,
                                    -bound, bound).astype(dtype)
        bias = jax.random.uniform(k_b, (hidden,), jnp.float32,
                                  -bound, bound).astype(dtype)
        hidden_states = jax.random.normal(k_h, (batch, seq, hidden),
                                          jnp.float32).astype(dtype)
        input_tensor = jax.random.normal(k_r, (batch, seq, hidden),
                                         jnp.float32).astype(dtype)

        out = preln_bert_self_output_forward(hidden_states, input_tensor,
                                             weight, bias, **fwd_kwargs)
        out = jax.block_until_ready(out)
        assert out.shape == (batch, seq, hidden)
        assert out.dtype == dtype

        # Plain-JAX reference of the module (dropout = identity in eval),
        # computed in f32 at HIGHEST precision.
        ref = (jnp.einsum("bsh,oh->bso",
                          hidden_states.astype(jnp.float32),
                          weight.astype(jnp.float32),
                          precision=jax.lax.Precision.HIGHEST)
               + bias.astype(jnp.float32) + input_tensor.astype(jnp.float32))

        err = float(jnp.max(jnp.abs(out.astype(jnp.float32) - ref)))
        assert jnp.allclose(out.astype(jnp.float32), ref, atol=atol, rtol=rtol), \
            f"max |err| = {err} (B={batch} S={seq} H={hidden} {dtype})"

    # Tiny config from the spec (full-array blocks, grid (1, 1)).
    run_case(batch=2, seq=8, hidden=32, dtype=jnp.float32, atol=2e-3, rtol=2e-3)
    # Larger f32 config: weight fully resident, large row tile, grid (1, 1).
    run_case(batch=8, seq=128, hidden=256, dtype=jnp.float32, atol=2e-3, rtol=2e-3)
    # Multi-step M grid (weight DMA'd once, stays resident across row tiles).
    run_case(batch=8, seq=512, hidden=256, dtype=jnp.float32, atol=2e-3, rtol=2e-3)
    # Non-divisible M exercises the row-padding path.
    run_case(batch=3, seq=10, hidden=256, dtype=jnp.float32, atol=2e-3, rtol=2e-3)
    # bf16 data path (halved HBM traffic; tm forced to a multiple of 16).
    run_case(batch=4, seq=128, hidden=256, dtype=jnp.bfloat16, atol=6e-2, rtol=6e-2)
    # Artificially small VMEM budget forces the streamed-weight 2-D grid path
    # (activation tile resident, weight re-streamed per M tile).
    run_case(batch=8, seq=128, hidden=256, dtype=jnp.float32, atol=2e-3, rtol=2e-3,
             vmem_budget_bytes=(3 << 20) // 2)

    print("KERNEL_OK")
</pallas_src>

<mosaic_0001>
module attributes {stable_mosaic.version = 11 : i64} {
  func.func @_self_output_kernel(%arg0: i32, %arg1: i32, %arg2: memref<16x32xf32, #tpu.memory_space<vmem>>, %arg3: memref<32x32xf32, #tpu.memory_space<vmem>>, %arg4: memref<1x32xf32, #tpu.memory_space<vmem>>, %arg5: memref<16x32xf32, #tpu.memory_space<vmem>>, %arg6: memref<16x32xf32, #tpu.memory_space<vmem>>) attributes {dimension_semantics = [#tpu.dimension_semantics<parallel>, #tpu.dimension_semantics<parallel>], iteration_bounds = array<i64: 1, 1>, scalar_prefetch = 0 : i64, scratch_operands = 0 : i64, tpu.core_type = #tpu.core_type<tc>, window_params = [{transform_indices = @transform_0, window_bounds = array<i64: 16, 32>}, {transform_indices = @transform_1, window_bounds = array<i64: 32, 32>}, {transform_indices = @transform_2, window_bounds = array<i64: 1, 32>}, {transform_indices = @transform_3, window_bounds = array<i64: 16, 32>}, {transform_indices = @transform_4, window_bounds = array<i64: 16, 32>}]} {
    %c0 = arith.constant 0 : index
    %c0_0 = arith.constant 0 : index
    %0 = vector.load %arg2[%c0, %c0_0] : memref<16x32xf32, #tpu.memory_space<vmem>>, vector<16x32xf32>
    %c0_1 = arith.constant 0 : index
    %c0_2 = arith.constant 0 : index
    %1 = vector.load %arg3[%c0_1, %c0_2] : memref<32x32xf32, #tpu.memory_space<vmem>>, vector<32x32xf32>
    %cst = arith.constant dense<0.000000e+00> : vector<16x32xf32>
    %2 = tpu.matmul %0, %1, %cst {dimension_numbers = #tpu.dot_dimension_numbers<[1], [0], [0], [1], [0, 0, 1, 1], [], []>} : vector<16x32xf32>, vector<32x32xf32>, vector<16x32xf32> -> vector<16x32xf32>
    %c0_3 = arith.constant 0 : index
    %c0_4 = arith.constant 0 : index
    %3 = vector.load %arg4[%c0_3, %c0_4] : memref<1x32xf32, #tpu.memory_space<vmem>>, vector<1x32xf32>
    %4 = vector.broadcast %3 : vector<1x32xf32> to vector<16x32xf32>
    %5 = arith.addf %2, %4 : vector<16x32xf32>
    %c0_5 = arith.constant 0 : index
    %c0_6 = arith.constant 0 : index
    %6 = vector.load %arg5[%c0_5, %c0_6] : memref<16x32xf32, #tpu.memory_space<vmem>>, vector<16x32xf32>
    %7 = arith.addf %5, %6 : vector<16x32xf32>
    %c0_7 = arith.constant 0 : index
    %c0_8 = arith.constant 0 : index
    %8 = vector.load %arg6[%c0_7, %c0_8] : memref<16x32xf32, #tpu.memory_space<vmem>>, vector<16x32xf32>
    tpu.vector_store %arg6[%c0_7, %c0_8], %7 {strides = array<i32>} : memref<16x32xf32, #tpu.memory_space<vmem>>, vector<16x32xf32>,
    return
  }
  func.func @transform_0(%arg0: i32, %arg1: i32) -> (i32, i32) {
    %c0_i32 = arith.constant 0 : i32
    %c0_i32_0 = arith.constant 0 : i32
    return %arg0, %c0_i32 : i32, i32
  }
  func.func @transform_1(%arg0: i32, %arg1: i32) -> (i32, i32) {
    %c0_i32 = arith.constant 0 : i32
    %c0_i32_0 = arith.constant 0 : i32
    return %c0_i32, %arg1 : i32, i32
  }
  func.func @transform_2(%arg0: i32, %arg1: i32) -> (i32, i32) {
    %c0_i32 = arith.constant 0 : i32
    %c0_i32_0 = arith.constant 0 : i32
    return %c0_i32, %arg1 : i32, i32
  }
  func.func @transform_3(%arg0: i32, %arg1: i32) -> (i32, i32) {
    %c0_i32 = arith.constant 0 : i32
    return %arg0, %arg1 : i32, i32
  }
  func.func @transform_4(%arg0: i32, %arg1: i32) -> (i32, i32) {
    %c0_i32 = arith.constant 0 : i32
    return %arg0, %arg1 : i32, i32
  }
}

</mosaic_0001>

<llo_original>
// kernel: tpu_custom_call.1
$region0: #{tpu_custom_call.1}
  #allocation0 [shape = 'u32[]', space=smem, size = 0x4, offset = 0x4, fixed_abs, tag = 'smem constant byte address 0x4 - core index']
  #allocation1 [shape = 'u32[144,128]{1,0:T(1,128)}', space=vmem, size = 0x12000, scoped, tag = 'internal scratch']
  %s0 = inlined_call_operand.hbm [shape: f32[16,32], index: 0, kind: input, shape index: {}]
  %s1 = inlined_call_operand.hbm [shape: f32[32,32], index: 1, kind: input, shape index: {}]
  %s2 = inlined_call_operand.vmem [shape: f32[1,32], index: 2, kind: input, shape index: {}]
  %s3 = inlined_call_operand.hbm [shape: f32[16,32], index: 3, kind: input, shape index: {}]
  %s4 = inlined_call_operand.hbm [shape: f32[16,32], index: 4, kind: output, shape index: {}]
  %s5 = sld [smem:[#allocation0]]
  $region38: #{tpu_custom_call.1} parent=0
    _
  %s7 = ssub.s32 1, %s5
  %s8 = scalar_select 0, %s7, %s5
  $region1: #{tpu_custom_call.1} parent=0
    #allocation2 [shape = 'u8[8192]{0}', space=vmem, size = 0x2000, scoped, tag = 'input window, operand 0, single buffered']
    #allocation3 [shape = 's32[1]{0}', space=sflag, size = 0x4, scoped, tag = 'scoped memory for tpu_custom_call.1']
    #allocation4 [shape = 's32[1]{0}', space=sflag, size = 0x4, scoped, tag = 'scoped memory for tpu_custom_call.1']
    #allocation5 [shape = 'u8[16384]{0}', space=vmem, size = 0x4000, scoped, tag = 'input window, operand 1, single buffered']
    #allocation6 [shape = 's32[1]{0}', space=sflag, size = 0x4, scoped, tag = 'scoped memory for tpu_custom_call.1']
    #allocation7 [shape = 'u8[8192]{0}', space=vmem, size = 0x2000, scoped, tag = 'input window, operand 3, single buffered']
    #allocation8 [shape = 'u8[8192]{0}', space=vmem, size = 0x2000, scoped, tag = 'output window, operand 0, single buffered']
    %9 = vsyncpa [#allocation3], 0
    %10 = vsyncpa [#allocation6], 0
    %11 = vsyncpa [#allocation4], 0
    // Predicated region
    $region2: #{tpu_custom_call.1} parent=1 // pred_check
      _
    $region3: #{tpu_custom_call.1} parent=1 // pred_check_branch
      %13 = sbr.rel (0) target = $region5
    $region4: #{tpu_custom_call.1} parent=1 // pred_region
      %s15 = ssub.s32 256, 256
      %16 = vsyncadd [#allocation3], %s15
      %s17 = sshll.u32 [#allocation2], 4
      %s18 = int_to_ptr.vmem [resolvable:$true] %s17
      %23 = dma.hbm_to_vmem [thread:$0]  %s0, 256, %s18, [#allocation3], 128, 128, 8
    $region5: #{tpu_custom_call.1} parent=1 // pred_fallthru
      _
    // Predicated region
    $region6: #{tpu_custom_call.1} parent=1 // pred_check
      _
    $region7: #{tpu_custom_call.1} parent=1 // pred_check_branch
      %25 = sbr.rel (0) target = $region9
    $region8: #{tpu_custom_call.1} parent=1 // pred_region
      %s27 = ssub.s32 512, 512
      %28 = vsyncadd [#allocation6], %s27
      %s29 = sshll.u32 [#allocation5], 4
      %s30 = int_to_ptr.vmem [resolvable:$true] %s29
      %35 = dma.hbm_to_vmem [thread:$0]  %s1, 512, %s30, [#allocation6], 128, 128, 8
    $region9: #{tpu_custom_call.1} parent=1 // pred_fallthru
      _
    // Predicated region
    $region10: #{tpu_custom_call.1} parent=1 // pred_check
      _
    $region11: #{tpu_custom_call.1} parent=1 // pred_check_branch
      %37 = sbr.rel (0) target = $region13
    $region12: #{tpu_custom_call.1} parent=1 // pred_region
      _
    $region13: #{tpu_custom_call.1} parent=1 // pred_fallthru
      _
    // Predicated region
    $region14: #{tpu_custom_call.1} parent=1 // pred_check
      _
    $region15: #{tpu_custom_call.1} parent=1 // pred_check_branch
      %39 = sbr.rel (0) target = $region17
    $region16: #{tpu_custom_call.1} parent=1 // pred_region
      %s41 = ssub.s32 256, 256
      %42 = vsyncadd [#allocation6], %s41
      %s43 = sshll.u32 [#allocation7], 4
      %s44 = int_to_ptr.vmem [resolvable:$true] %s43
      %49 = dma.hbm_to_vmem [thread:$0]  %s3, 256, %s44, [#allocation6], 128, 128, 8
    $region17: #{tpu_custom_call.1} parent=1 // pred_fallthru
      _
    // Predicated region
    $region18: #{tpu_custom_call.1} parent=1 // pred_check
      _
    $region19: #{tpu_custom_call.1} parent=1 // pred_check_branch
      %51 = sbr.rel (0) target = $region21
    $region20: #{tpu_custom_call.1} parent=1 // pred_region
      %52 = dma.done [#allocation3], 256
    $region21: #{tpu_custom_call.1} parent=1 // pred_fallthru
      _
    // Predicated region
    $region22: #{tpu_custom_call.1} parent=1 // pred_check
      _
    $region23: #{tpu_custom_call.1} parent=1 // pred_check_branch
      %54 = sbr.rel (0) target = $region25
    $region24: #{tpu_custom_call.1} parent=1 // pred_region
      %55 = dma.done [#allocation6], 512
    $region25: #{tpu_custom_call.1} parent=1 // pred_fallthru
      _
    // Predicated region
    $region26: #{tpu_custom_call.1} parent=1 // pred_check
      _
    $region27: #{tpu_custom_call.1} parent=1 // pred_check_branch
      %57 = sbr.rel (0) target = $region29
    $region28: #{tpu_custom_call.1} parent=1 // pred_region
      %58 = dma.done [#allocation6], 256
    $region29: #{tpu_custom_call.1} parent=1 // pred_fallthru
      _
    %v59 = vld [vmem:[#allocation2] sm:$0xff]
    %v60 = vld [vmem:[#allocation2 + $0x8] sm:$0xff]
    %v61 = vld [vmem:[#allocation5] sm:$0xff]
    %v62 = vld [vmem:[#allocation5 + $0x8] sm:$0xff]
    %v63 = vld [vmem:[#allocation5 + $0x10] sm:$0xff]
    %v64 = vld [vmem:[#allocation5 + $0x18] sm:$0xff]
    %v65 = vld [vmem:[%s2] sm:$0x1]
    %v67 = vlaneseq
    %v68 = vshrl.u32 %v67, 7
    %v69 = vsub.s32 0, %v68
    %v70 = vrot.slane %v65, %v69
    %vm72 = vcmask 261120
    %v74 = vsel %vm72, %v59, 0
    %v77 = vsel %vm72, %v60, 0
    %79 = vmatprep.subr.mxu0 0.0
    %80 = vmatpush1.msra.mxu0 %v61
    %81 = vmatprep.subr.mxu0 0.0
    %82 = vmatpush1.msra.mxu0 %v62
    %83 = vmatprep.subr.mxu0 0.0
    %84 = vmatpush1.msra.mxu0 %v63
    %85 = vmatprep.subr.mxu0 0.0
    %86 = vmatpush1.msra.mxu0 %v64
    %87 = vmatprep.subr.mxu0 0.0
    %88 = vmatpush1.msra.mxu0 0.0
    %89 = vmatprep.subr.mxu0 0.0
    %90 = vmatpush1.msra.mxu0 0.0
    %91 = vmatprep.subr.mxu0 0.0
    %92 = vmatpush1.msra.mxu0 0.0
    %93 = vmatprep.subr.mxu0 0.0
    %94 = vmatpush1.msra.mxu0 0.0
    %95 = vmatprep.subr.mxu0 0.0
    %96 = vmatpush1.msra.mxu0 0.0
    %97 = vmatprep.subr.mxu0 0.0
    %98 = vmatpush1.msra.mxu0 0.0
    %99 = vmatprep.subr.mxu0 0.0
    %100 = vmatpush1.msra.mxu0 0.0
    %101 = vmatprep.subr.mxu0 0.0
    %102 = vmatpush1.msra.mxu0 0.0
    %103 = vmatprep.subr.mxu0 0.0
    %104 = vmatpush1.msra.mxu0 0.0
    %105 = vmatprep.subr.mxu0 0.0
    %106 = vmatpush1.msra.mxu0 0.0
    %107 = vmatprep.subr.mxu0 0.0
    %108 = vmatpush1.msra.mxu0 0.0
    %109 = vmatprep.subr.mxu0 0.0
    %110 = vmatpush1.msra.mxu0 0.0
    %111 = vmatprep.subr.mxu0 0.0
    %112 = vmatpush1.msra.mxu0 0.0
    %113 = vmatprep.subr.mxu0 0.0
    %114 = vmatpush1.msra.mxu0 0.0
    %115 = vmatprep.subr.mxu0 0.0
    %116 = vmatpush1.msra.mxu0 0.0
    %117 = vmatprep.subr.mxu0 0.0
    %118 = vmatpush1.msra.mxu0 0.0
    %119 = vmatprep.subr.mxu0 0.0
    %120 = vmatpush1.msra.mxu0 0.0
    %121 = vmatprep.subr.mxu0 0.0
    %122 = vmatpush1.msra.mxu0 0.0
    %123 = vmatprep.subr.mxu0 0.0
    %124 = vmatpush1.msra.mxu0 0.0
    %125 = vmatprep.subr.mxu0 0.0
    %126 = vmatpush1.msra.mxu0 0.0
    %127 = vmatprep.subr.mxu0 0.0
    %128 = vmatpush1.msra.mxu0 0.0
    %129 = vmatprep.subr.mxu0 0.0
    %130 = vmatpush1.msra.mxu0 0.0
    %131 = vmatprep.subr.mxu0 0.0
    %132 = vmatpush1.msra.mxu0 0.0
    %133 = vmatprep.subr.mxu0 0.0
    %134 = vmatpush1.msra.mxu0 0.0
    %135 = vmatprep.subr.mxu0 0.0
    %136 = vmatpush1.msra.mxu0 0.0
    %137 = vmatprep.subr.mxu0 0.0
    %138 = vmatpush1.msra.mxu0 0.0
    %139 = vmatprep.subr.mxu0 0.0
    %140 = vmatpush1.msra.mxu0 0.0
    %141 = vmatprep.subr.mxu0 0.0
    %142 = vmatpush1.msra.mxu0 0.0
    %143 = vmatprep.mubr.f32.mxu0 0.0
    %144 = vmatmul.mubr.f32.gmra.mrb[0].mxu0 %v74
    %v145 = vpop.f32.mrb[0].mxu0
    %v146 = vadd.f32 %v70, %v145
    %v147 = vpop.f32.mrb[0].mxu0
    %148 = vmatprep.mubr.f32.mxu0 0.0
    %149 = vmatmul.mubr.f32.gmra.mrb[0].mxu0 %v77
    %v150 = vpop.f32.mrb[0].mxu0
    %v151 = vadd.f32 %v70, %v150
    %v152 = vpop.f32.mrb[0].mxu0
    %153 = vdwg.mxu0
    %v154 = vld [vmem:[#allocation7] sm:$0xff]
    %v155 = vld [vmem:[#allocation7 + $0x8] sm:$0xff]
    %v156 = vadd.f32 %v146, %v154
    %v157 = vadd.f32 %v151, %v155
    %158 = vst.msk [vmem:[#allocation8] sm:$0xff] %vm72, %v156
    %159 = vst.msk [vmem:[#allocation8 + $0x8] sm:$0xff] %vm72, %v157
    // Predicated region
    $region30: #{tpu_custom_call.1} parent=1 // pred_check
      _
    $region31: #{tpu_custom_call.1} parent=1 // pred_check_branch
      %161 = sbr.rel (0) target = $region33
    $region32: #{tpu_custom_call.1} parent=1 // pred_region
      %s163 = ssub.s32 256, 256
      %164 = vsyncadd [#allocation4], %s163
      %s165 = sshll.u32 [#allocation8], 4
      %s166 = int_to_ptr.vmem [resolvable:$true] %s165
      %171 = dma.vmem_to_hbm [thread:$0]  %s166, 256, %s4, [#allocation4], 128, 128, 8
    $region33: #{tpu_custom_call.1} parent=1 // pred_fallthru
      _
    // Predicated region
    $region34: #{tpu_custom_call.1} parent=1 // pred_check
      _
    $region35: #{tpu_custom_call.1} parent=1 // pred_check_branch
      %173 = sbr.rel (0) target = $region37
    $region36: #{tpu_custom_call.1} parent=1 // pred_region
      %174 = dma.done [#allocation4], 256
    $region37: #{tpu_custom_call.1} parent=1 // pred_fallthru
      _
    %175 = vsyncpa [#allocation3], 1
    %176 = vsyncpa [#allocation6], 1
    %177 = vsyncpa [#allocation4], 1

</llo_original>
